<compile_context>
chip_gen: v7x
topology: tpu7x:2x2x1
jax: 0.10.0
libtpu: 0.0.40
codegen_flags: <defaults>
</compile_context>

<pallas_src>
import functools

import jax
import jax.numpy as jnp
from jax import lax
from jax.experimental import pallas as pl
from jax.experimental.pallas import tpu as pltpu

NUM_CLASSES = 10                 # model head width
NUM_VARIANT = 2                  # variant head width
FUSED = NUM_CLASSES + NUM_VARIANT
FUSED_PAD = 128                  # lane-dense padded width of the fused projection

_VMEM_LIMIT = 32 * 1024 * 1024   # plenty of headroom on v5e/v6e/v7x


def _round_up(v, m):
    return (v + m - 1) // m * m


def _argmax_last(a, num_cols):
    """First-occurrence argmax along the last axis, keepdims. a: (R, C) f32 -> (R, 1) i32."""
    col = lax.broadcasted_iota(jnp.int32, a.shape, 1)
    maxv = jnp.max(a, axis=1, keepdims=True)
    idx = jnp.where(a == maxv, col, jnp.int32(num_cols))
    return jnp.min(idx, axis=1, keepdims=True)


def _pi_membership(y, block_n, row_offset, n_rows):
    """(1, 10) bool: which classes appear in {(argmax(y[m])+1) % 10} over valid rows."""
    idx = _argmax_last(y, NUM_CLASSES)                         # (TN, 1) i32
    pi = jnp.where(idx == NUM_CLASSES - 1, 0, idx + 1)         # mod -> select
    rows = row_offset + lax.broadcasted_iota(jnp.int32, (block_n, 1), 0)
    valid = rows < n_rows                                      # mask padding rows
    classes = lax.broadcasted_iota(jnp.int32, (block_n, NUM_CLASSES), 1)
    hit = (pi == classes) & valid                              # (TN, 10) bool
    return jnp.any(hit, axis=0, keepdims=True)                 # (1, 10) bool


def _variant_flag(yz):
    """argmax(variant logits) == 1  <=>  strict v1 > v0 (keeps first-occurrence tie-break)."""
    return yz[:, NUM_CLASSES + 1:NUM_CLASSES + 2] > yz[:, NUM_CLASSES:NUM_CLASSES + 1]


# ---------- single-tile fast path: everything fused in one kernel -------------

def _fused_kernel(x_ref, w_ref, b_ref, out_ref, *, n_rows, block_n):
    yz = jnp.dot(x_ref[...], w_ref[...], preferred_element_type=jnp.float32)
    yz = yz + b_ref[...]                                       # (TN, 128) f32
    y = yz[:, :NUM_CLASSES]                                    # (TN, 10)
    in_pi = _pi_membership(y, block_n, 0, n_rows)              # (1, 10) bool
    mask = _variant_flag(yz) & in_pi                           # (TN,1) & (1,10)
    out_ref[...] = jnp.where(mask, y + 1000.0, y)


# ---------- pass 1: fused projection + batch-global pi-set reduction ----------

def _project_reduce_kernel(x_ref, w_ref, b_ref, ypad_ref, inpi_ref, *,
                           n_rows, block_n):
    i = pl.program_id(0)

    yz = jnp.dot(x_ref[...], w_ref[...], preferred_element_type=jnp.float32)
    yz = yz + b_ref[...]
    ypad_ref[...] = yz                                         # lane-dense (TN,128) store

    tile_member = _pi_membership(yz[:, :NUM_CLASSES], block_n,
                                 i * block_n, n_rows).astype(jnp.float32)

    # Batch-global membership: accumulate across the (arbitrary) batch axis in
    # a carried output block.
    @pl.when(i == 0)
    def _():
        inpi_ref[...] = jnp.zeros_like(inpi_ref)

    inpi_ref[...] = jnp.maximum(inpi_ref[...], tile_member)


# ---------- pass 2: apply the +1000 mask (per-tile independent) ---------------

def _apply_mask_kernel(ypad_ref, inpi_ref, out_ref):
    yz = ypad_ref[...]                                         # (TN, 128) f32
    y = yz[:, :NUM_CLASSES]                                    # (TN, 10)
    mask = _variant_flag(yz) & (inpi_ref[...] > 0.5)           # (TN,1) & (1,10)
    out_ref[...] = jnp.where(mask, y + 1000.0, y)


# ---------- wrapper ------------------------------------------------------------

def capsulated_forward(x_nchw, wm, bm, wv, bv, *, block_n=512,
                       compute_dtype=jnp.bfloat16):
    n, c, h, w = x_nchw.shape
    d = c * h * w

    # bf16 inputs / f32 accumulation is MXU-native on v5e/v6e/v7x.
    x_flat = x_nchw.reshape(n, d).astype(compute_dtype)

    # Fused, lane-dense projection weight: [wm | wv | zero pad] -> (D, 128).
    w_fused = jnp.zeros((d, FUSED_PAD), jnp.float32)
    w_fused = w_fused.at[:, :NUM_CLASSES].set(wm.astype(jnp.float32))
    w_fused = w_fused.at[:, NUM_CLASSES:FUSED].set(wv.astype(jnp.float32))
    w_fused = w_fused.astype(compute_dtype)

    b_fused = jnp.zeros((1, FUSED_PAD), jnp.float32)
    b_fused = b_fused.at[:, :NUM_CLASSES].set(
        bm.reshape(1, NUM_CLASSES).astype(jnp.float32))
    b_fused = b_fused.at[:, NUM_CLASSES:FUSED].set(
        bv.reshape(1, NUM_VARIANT).astype(jnp.float32))

    # Batch tile: multiple of 8 sublanes, clamped to the (padded) batch.
    bn = min(_round_up(block_n, 8), _round_up(n, 8))
    num_tiles = pl.cdiv(n, bn)

    x_spec = pl.BlockSpec((bn, d), lambda i: (i, 0))
    w_spec = pl.BlockSpec((d, FUSED_PAD), lambda i: (0, 0))
    b_spec = pl.BlockSpec((1, FUSED_PAD), lambda i: (0, 0))

    if num_tiles == 1:
        # Fast path: whole batch in one tile -> no intermediate slab, one launch.
        kernel = functools.partial(_fused_kernel, n_rows=n, block_n=bn)
        return pl.pallas_call(
            kernel,
            out_shape=jax.ShapeDtypeStruct((n, NUM_CLASSES), jnp.float32),
            grid=(1,),
            in_specs=[x_spec, w_spec, b_spec],
            out_specs=pl.BlockSpec((bn, NUM_CLASSES), lambda i: (0, 0)),
            compiler_params=pltpu.CompilerParams(
                dimension_semantics=("arbitrary",),
                vmem_limit_bytes=_VMEM_LIMIT),
        )(x_flat, w_fused, b_fused)

    cparams1 = pltpu.CompilerParams(
        dimension_semantics=("arbitrary",),            # in_pi is a carried reduction
        vmem_limit_bytes=_VMEM_LIMIT)
    cparams2 = pltpu.CompilerParams(
        dimension_semantics=("parallel",),             # independent tiles (megacore)
        vmem_limit_bytes=_VMEM_LIMIT)

    kernel1 = functools.partial(_project_reduce_kernel, n_rows=n, block_n=bn)

    y_pad, in_pi = pl.pallas_call(
        kernel1,
        out_shape=(jax.ShapeDtypeStruct((n, FUSED_PAD), jnp.float32),
                   jax.ShapeDtypeStruct((1, NUM_CLASSES), jnp.float32)),
        grid=(num_tiles,),
        in_specs=[x_spec, w_spec, b_spec],
        out_specs=(
            pl.BlockSpec((bn, FUSED_PAD), lambda i: (i, 0)),
            pl.BlockSpec((1, NUM_CLASSES), lambda i: (0, 0)),
        ),
        compiler_params=cparams1,
    )(x_flat, w_fused, b_fused)

    y_out = pl.pallas_call(
        _apply_mask_kernel,
        out_shape=jax.ShapeDtypeStruct((n, NUM_CLASSES), jnp.float32),
        grid=(num_tiles,),
        in_specs=[
            pl.BlockSpec((bn, FUSED_PAD), lambda i: (i, 0)),
            pl.BlockSpec((1, NUM_CLASSES), lambda i: (0, 0)),
        ],
        out_specs=pl.BlockSpec((bn, NUM_CLASSES), lambda i: (i, 0)),
        compiler_params=cparams2,
    )(y_pad, in_pi)

    return y_out


def capsulated_reference(x_nchw, wm, bm, wv, bv, compute_dtype=jnp.float32):
    """Pure-JAX reference mirroring the PyTorch loop semantics."""
    n = x_nchw.shape[0]
    x_flat = x_nchw.reshape(n, -1).astype(compute_dtype)
    y = jnp.dot(x_flat, wm.astype(compute_dtype),
                preferred_element_type=jnp.float32) + bm.reshape(1, -1)
    v = jnp.dot(x_flat, wv.astype(compute_dtype),
                preferred_element_type=jnp.float32) + bv.reshape(1, -1)
    pi = (jnp.argmax(y, axis=1) + 1) % NUM_CLASSES        # (N,)
    variant = jnp.argmax(v, axis=1)                       # (N,)
    in_pi = jnp.zeros((NUM_CLASSES,), bool).at[pi].set(True)
    mask = (variant == 1)[:, None] & in_pi[None, :]
    return jnp.where(mask, y + 1000.0, y)


if __name__ == "__main__":
    key = jax.random.PRNGKey(0)
    kx, kwm, kbm, kwv, kbv, kx2 = jax.random.split(key, 6)

    N, C, H, W = 2, 4, 16, 16
    D = C * H * W

    x = jax.random.normal(kx, (N, C, H, W), dtype=jnp.float32)
    wm = jax.random.normal(kwm, (D, NUM_CLASSES), dtype=jnp.float32) * 0.05
    bm = jax.random.normal(kbm, (1, NUM_CLASSES), dtype=jnp.float32) * 0.05
    wv = jax.random.normal(kwv, (D, NUM_VARIANT), dtype=jnp.float32) * 0.05
    bv = jax.random.normal(kbv, (1, NUM_VARIANT), dtype=jnp.float32) * 0.05

    # f32 path (single-tile fused kernel): tight-tolerance check vs pure-JAX ref.
    out_f32 = jax.block_until_ready(
        capsulated_forward(x, wm, bm, wv, bv, compute_dtype=jnp.float32))
    ref_f32 = capsulated_reference(x, wm, bm, wv, bv, compute_dtype=jnp.float32)
    assert out_f32.shape == (N, NUM_CLASSES)
    assert jnp.allclose(out_f32, ref_f32, atol=1e-3, rtol=1e-3), (out_f32, ref_f32)

    # bf16-input / f32-accumulate fast path, compared against a reference that
    # applies the same bf16 cast (only accumulation order differs).
    out_bf16 = jax.block_until_ready(
        capsulated_forward(x, wm, bm, wv, bv, compute_dtype=jnp.bfloat16))
    ref_bf16 = capsulated_reference(x, wm, bm, wv, bv, compute_dtype=jnp.bfloat16)
    assert jnp.allclose(out_bf16, ref_bf16, atol=2e-2, rtol=2e-2), (out_bf16, ref_bf16)

    # Multi-tile / ragged-boundary path: exercises the two-pass batch-global
    # pi-set reduction across several tiles plus boundary-row masking.
    N2 = 50
    x2 = jax.random.normal(kx2, (N2, C, H, W), dtype=jnp.float32)
    out2 = jax.block_until_ready(
        capsulated_forward(x2, wm, bm, wv, bv, block_n=16,
                           compute_dtype=jnp.float32))
    ref2 = capsulated_reference(x2, wm, bm, wv, bv, compute_dtype=jnp.float32)
    assert out2.shape == (N2, NUM_CLASSES)
    assert jnp.allclose(out2, ref2, atol=1e-3, rtol=1e-3), (out2, ref2)

    print("KERNEL_OK")
</pallas_src>

<mosaic_0001>
module attributes {stable_mosaic.version = 11 : i64} {
  func.func @_fused_kernel(%arg0: i32, %arg1: memref<8x1024xf32, #tpu.memory_space<vmem>>, %arg2: memref<1024x128xf32, #tpu.memory_space<vmem>>, %arg3: memref<1x128xf32, #tpu.memory_space<vmem>>, %arg4: memref<8x10xf32, #tpu.memory_space<vmem>>) attributes {dimension_semantics = [#tpu.dimension_semantics<arbitrary>], iteration_bounds = array<i64: 1>, scalar_prefetch = 0 : i64, scratch_operands = 0 : i64, tpu.core_type = #tpu.core_type<tc>, window_params = [{transform_indices = @transform_0, window_bounds = array<i64: 8, 1024>}, {pipeline_mode = #tpu.pipeline_mode<synchronous>, transform_indices = @transform_1, window_bounds = array<i64: 1024, 128>}, {pipeline_mode = #tpu.pipeline_mode<synchronous>, transform_indices = @transform_2, window_bounds = array<i64: 1, 128>}, {transform_indices = @transform_3, window_bounds = array<i64: 8, 10>}]} {
    %c0 = arith.constant 0 : index
    %c0_0 = arith.constant 0 : index
    %0 = vector.load %arg1[%c0, %c0_0] : memref<8x1024xf32, #tpu.memory_space<vmem>>, vector<8x1024xf32>
    %c0_1 = arith.constant 0 : index
    %c0_2 = arith.constant 0 : index
    %1 = vector.load %arg2[%c0_1, %c0_2] : memref<1024x128xf32, #tpu.memory_space<vmem>>, vector<1024x128xf32>
    %cst = arith.constant dense<0.000000e+00> : vector<8x128xf32>
    %2 = tpu.matmul %0, %1, %cst {dimension_numbers = #tpu.dot_dimension_numbers<[1], [0], [0], [1], [0, 0, 1, 1], [], []>} : vector<8x1024xf32>, vector<1024x128xf32>, vector<8x128xf32> -> vector<8x128xf32>
    %c0_3 = arith.constant 0 : index
    %c0_4 = arith.constant 0 : index
    %3 = vector.load %arg3[%c0_3, %c0_4] : memref<1x128xf32, #tpu.memory_space<vmem>>, vector<1x128xf32>
    %4 = vector.broadcast %3 : vector<1x128xf32> to vector<8x128xf32>
    %5 = arith.addf %2, %4 : vector<8x128xf32>
    %6 = vector.extract_strided_slice %5 {offsets = [0, 0], sizes = [8, 10], strides = [1, 1]} : vector<8x128xf32> to vector<8x10xf32>
    %7 = tpu.iota {dimensions = array<i32: 1>} : vector<8x10xi32>
    %cst_5 = arith.constant dense<0xFF800000> : vector<8xf32>
    %8 = vector.multi_reduction <maximumf>, %6, %cst_5 [1] : vector<8x10xf32> to vector<8xf32>
    %9 = vector.shape_cast %8 : vector<8xf32> to vector<8x1xf32>
    %10 = vector.broadcast %9 : vector<8x1xf32> to vector<8x10xf32>
    %11 = arith.cmpf oeq, %6, %10 : vector<8x10xf32>
    %c10_i32 = arith.constant 10 : i32
    %12 = vector.broadcast %c10_i32 : i32 to vector<8x10xi32>
    %13 = arith.select %11, %7, %12 : vector<8x10xi1>, vector<8x10xi32>
    %cst_6 = arith.constant dense<2147483647> : vector<8xi32>
    %14 = vector.multi_reduction <minsi>, %13, %cst_6 [1] : vector<8x10xi32> to vector<8xi32>
    %15 = vector.shape_cast %14 : vector<8xi32> to vector<8x1xi32>
    %c9_i32 = arith.constant 9 : i32
    %16 = vector.broadcast %c9_i32 : i32 to vector<8x1xi32>
    %17 = arith.cmpi eq, %15, %16 : vector<8x1xi32>
    %c1_i32 = arith.constant 1 : i32
    %18 = vector.broadcast %c1_i32 : i32 to vector<8x1xi32>
    %19 = arith.addi %15, %18 : vector<8x1xi32>
    %c0_i32 = arith.constant 0 : i32
    %20 = vector.broadcast %c0_i32 : i32 to vector<8x1xi32>
    %21 = arith.select %17, %20, %19 : vector<8x1xi1>, vector<8x1xi32>
    %22 = tpu.iota {dimensions = array<i32: 0>} : vector<8x1xi32>
    %c0_i32_7 = arith.constant 0 : i32
    %23 = vector.broadcast %c0_i32_7 : i32 to vector<8x1xi32>
    %24 = arith.addi %23, %22 : vector<8x1xi32>
    %c2_i32 = arith.constant 2 : i32
    %25 = vector.broadcast %c2_i32 : i32 to vector<8x1xi32>
    %26 = arith.cmpi slt, %24, %25 : vector<8x1xi32>
    %27 = tpu.iota {dimensions = array<i32: 1>} : vector<8x10xi32>
    %28 = vector.broadcast %21 : vector<8x1xi32> to vector<8x10xi32>
    %29 = arith.cmpi eq, %28, %27 : vector<8x10xi32>
    %30 = vector.broadcast %26 : vector<8x1xi1> to vector<8x10xi1>
    %31 = arith.andi %29, %30 : vector<8x10xi1>
    %cst_8 = arith.constant 1.000000e+00 : f32
    %cst_9 = arith.constant 0.000000e+00 : f32
    %32 = vector.broadcast %cst_8 : f32 to vector<8x10xf32>
    %33 = vector.broadcast %cst_9 : f32 to vector<8x10xf32>
    %34 = arith.select %31, %32, %33 : vector<8x10xi1>, vector<8x10xf32>
    %cst_10 = arith.constant dense<0xFF800000> : vector<10xf32>
    %35 = vector.multi_reduction <maximumf>, %34, %cst_10 [0] : vector<8x10xf32> to vector<10xf32>
    %cst_11 = arith.constant 0.000000e+00 : f32
    %36 = vector.broadcast %cst_11 : f32 to vector<10xf32>
    %37 = arith.cmpf ogt, %35, %36 : vector<10xf32>
    %38 = vector.shape_cast %37 : vector<10xi1> to vector<1x10xi1>
    %39 = vector.extract_strided_slice %5 {offsets = [0, 11], sizes = [8, 1], strides = [1, 1]} : vector<8x128xf32> to vector<8x1xf32>
    %40 = vector.extract_strided_slice %5 {offsets = [0, 10], sizes = [8, 1], strides = [1, 1]} : vector<8x128xf32> to vector<8x1xf32>
    %41 = arith.cmpf ogt, %39, %40 : vector<8x1xf32>
    %42 = vector.broadcast %41 : vector<8x1xi1> to vector<8x10xi1>
    %43 = vector.broadcast %38 : vector<1x10xi1> to vector<8x10xi1>
    %44 = arith.andi %42, %43 : vector<8x10xi1>
    %cst_12 = arith.constant 1.000000e+03 : f32
    %45 = vector.broadcast %cst_12 : f32 to vector<8x10xf32>
    %46 = arith.addf %6, %45 : vector<8x10xf32>
    %47 = arith.select %44, %46, %6 : vector<8x10xi1>, vector<8x10xf32>
    %c0_13 = arith.constant 0 : index
    %c0_14 = arith.constant 0 : index
    %48 = vector.load %arg4[%c0_13, %c0_14] : memref<8x10xf32, #tpu.memory_space<vmem>>, vector<8x10xf32>
    tpu.vector_store %arg4[%c0_13, %c0_14], %47 {strides = array<i32>} : memref<8x10xf32, #tpu.memory_space<vmem>>, vector<8x10xf32>,
    return
  }
  func.func @transform_0(%arg0: i32) -> (i32, i32) {
    %c0_i32 = arith.constant 0 : i32
    %c0_i32_0 = arith.constant 0 : i32
    return %arg0, %c0_i32 : i32, i32
  }
  func.func @transform_1(%arg0: i32) -> (i32, i32) {
    %c0_i32 = arith.constant 0 : i32
    %c0_i32_0 = arith.constant 0 : i32
    %c0_i32_1 = arith.constant 0 : i32
    return %c0_i32, %c0_i32_0 : i32, i32
  }
  func.func @transform_2(%arg0: i32) -> (i32, i32) {
    %c0_i32 = arith.constant 0 : i32
    %c0_i32_0 = arith.constant 0 : i32
    %c0_i32_1 = arith.constant 0 : i32
    return %c0_i32, %c0_i32_0 : i32, i32
  }
  func.func @transform_3(%arg0: i32) -> (i32, i32) {
    %c0_i32 = arith.constant 0 : i32
    %c0_i32_0 = arith.constant 0 : i32
    %c0_i32_1 = arith.constant 0 : i32
    return %c0_i32, %c0_i32_0 : i32, i32
  }
}

</mosaic_0001>

<llo_original>
// kernel: tpu_custom_call.1
$region0: #{tpu_custom_call.1}
  #allocation0 [shape = 'u32[]', space=smem, size = 0x4, offset = 0x4, fixed_abs, tag = 'smem constant byte address 0x4 - core index']
  #allocation1 [shape = 'u32[144,128]{1,0:T(1,128)}', space=vmem, size = 0x12000, scoped, tag = 'internal scratch']
  %s0 = inlined_call_operand.hbm [shape: f32[2,1024], index: 0, kind: input, shape index: {}]
  %s1 = inlined_call_operand.hbm [shape: f32[1024,128], index: 1, kind: input, shape index: {}]
  %s2 = inlined_call_operand.vmem [shape: f32[1,128], index: 2, kind: input, shape index: {}]
  %s3 = inlined_call_operand.hbm [shape: f32[2,10], index: 3, kind: output, shape index: {}]
  %s4 = sld [smem:[#allocation0]]
  $region30: #{tpu_custom_call.1} parent=0
    _
  %s6 = ssub.s32 1, %s4
  %s7 = scalar_select 0, %s6, %s4
  $region1: #{tpu_custom_call.1} parent=0
    #allocation2 [shape = 'u8[32768]{0}', space=vmem, size = 0x8000, scoped, tag = 'input window, operand 0, single buffered']
    #allocation3 [shape = 's32[1]{0}', space=sflag, size = 0x4, scoped, tag = 'scoped memory for tpu_custom_call.1']
    #allocation4 [shape = 's32[1]{0}', space=sflag, size = 0x4, scoped, tag = 'scoped memory for tpu_custom_call.1']
    #allocation5 [shape = 'u8[524288]{0}', space=vmem, size = 0x80000, scoped, tag = 'input window, operand 1, single buffered']
    #allocation6 [shape = 's32[1]{0}', space=sflag, size = 0x4, scoped, tag = 'scoped memory for tpu_custom_call.1']
    #allocation7 [shape = 'u8[4096]{0}', space=vmem, size = 0x1000, scoped, tag = 'output window, operand 0, single buffered']
    %8 = vsyncpa [#allocation3], 0
    %9 = vsyncpa [#allocation6], 0
    %10 = vsyncpa [#allocation4], 0
    // Predicated region
    $region2: #{tpu_custom_call.1} parent=1 // pred_check
      _
    $region3: #{tpu_custom_call.1} parent=1 // pred_check_branch
      %12 = sbr.rel (0) target = $region5
    $region4: #{tpu_custom_call.1} parent=1 // pred_region
      %s14 = ssub.s32 1024, 256
      %15 = vsyncadd [#allocation3], %s14
      %s16 = sshll.u32 [#allocation2], 4
      %s17 = int_to_ptr.vmem [resolvable:$true] %s16
      %22 = dma.hbm_to_vmem [thread:$0]  %s0, 256, %s17, [#allocation3], 256, 256, 16
    $region5: #{tpu_custom_call.1} parent=1 // pred_fallthru
      _
    // Predicated region
    $region6: #{tpu_custom_call.1} parent=1 // pred_check
      _
    $region7: #{tpu_custom_call.1} parent=1 // pred_check_branch
      %24 = sbr.rel (0) target = $region9
    $region8: #{tpu_custom_call.1} parent=1 // pred_region
      %s26 = ssub.s32 16384, 16384
      %27 = vsyncadd [#allocation6], %s26
      %s28 = sshll.u32 [#allocation5], 4
      %s29 = int_to_ptr.vmem [resolvable:$true] %s28
      %34 = dma.hbm_to_vmem [thread:$0]  %s1, 16384, %s29, [#allocation6], 128, 128, 8
    $region9: #{tpu_custom_call.1} parent=1 // pred_fallthru
      _
    // Predicated region
    $region10: #{tpu_custom_call.1} parent=1 // pred_check
      _
    $region11: #{tpu_custom_call.1} parent=1 // pred_check_branch
      %36 = sbr.rel (0) target = $region13
    $region12: #{tpu_custom_call.1} parent=1 // pred_region
      _
    $region13: #{tpu_custom_call.1} parent=1 // pred_fallthru
      _
    // Predicated region
    $region14: #{tpu_custom_call.1} parent=1 // pred_check
      _
    $region15: #{tpu_custom_call.1} parent=1 // pred_check_branch
      %38 = sbr.rel (0) target = $region17
    $region16: #{tpu_custom_call.1} parent=1 // pred_region
      %39 = dma.done [#allocation3], 1024
    $region17: #{tpu_custom_call.1} parent=1 // pred_fallthru
      _
    // Predicated region
    $region18: #{tpu_custom_call.1} parent=1 // pred_check
      _
    $region19: #{tpu_custom_call.1} parent=1 // pred_check_branch
      %41 = sbr.rel (0) target = $region21
    $region20: #{tpu_custom_call.1} parent=1 // pred_region
      %42 = dma.done [#allocation6], 16384
    $region21: #{tpu_custom_call.1} parent=1 // pred_fallthru
      _
    %v43 = vld [vmem:[#allocation2] sm:$0xff]
    %v44 = vld [vmem:[#allocation2 + $0x8] sm:$0xff]
    %v45 = vld [vmem:[#allocation2 + $0x10] sm:$0xff]
    %v46 = vld [vmem:[#allocation2 + $0x18] sm:$0xff]
    %v47 = vld [vmem:[#allocation2 + $0x20] sm:$0xff]
    %v48 = vld [vmem:[#allocation2 + $0x28] sm:$0xff]
    %v49 = vld [vmem:[#allocation2 + $0x30] sm:$0xff]
    %v50 = vld [vmem:[#allocation2 + $0x38] sm:$0xff]
    %v51 = vld [vmem:[#allocation5] sm:$0xff]
    %v52 = vld [vmem:[#allocation5 + $0x8] sm:$0xff]
    %v53 = vld [vmem:[#allocation5 + $0x10] sm:$0xff]
    %v54 = vld [vmem:[#allocation5 + $0x18] sm:$0xff]
    %v55 = vld [vmem:[#allocation5 + $0x20] sm:$0xff]
    %v56 = vld [vmem:[#allocation5 + $0x28] sm:$0xff]
    %v57 = vld [vmem:[#allocation5 + $0x30] sm:$0xff]
    %v58 = vld [vmem:[#allocation5 + $0x38] sm:$0xff]
    %v59 = vld [vmem:[#allocation5 + $0x40] sm:$0xff]
    %v60 = vld [vmem:[#allocation5 + $0x48] sm:$0xff]
    %v61 = vld [vmem:[#allocation5 + $0x50] sm:$0xff]
    %v62 = vld [vmem:[#allocation5 + $0x58] sm:$0xff]
    %v63 = vld [vmem:[#allocation5 + $0x60] sm:$0xff]
    %v64 = vld [vmem:[#allocation5 + $0x68] sm:$0xff]
    %v65 = vld [vmem:[#allocation5 + $0x70] sm:$0xff]
    %v66 = vld [vmem:[#allocation5 + $0x78] sm:$0xff]
    %v67 = vld [vmem:[#allocation5 + $0x80] sm:$0xff]
    %v68 = vld [vmem:[#allocation5 + $0x88] sm:$0xff]
    %v69 = vld [vmem:[#allocation5 + $0x90] sm:$0xff]
    %v70 = vld [vmem:[#allocation5 + $0x98] sm:$0xff]
    %v71 = vld [vmem:[#allocation5 + $0xa0] sm:$0xff]
    %v72 = vld [vmem:[#allocation5 + $0xa8] sm:$0xff]
    %v73 = vld [vmem:[#allocation5 + $0xb0] sm:$0xff]
    %v74 = vld [vmem:[#allocation5 + $0xb8] sm:$0xff]
    %v75 = vld [vmem:[#allocation5 + $0xc0] sm:$0xff]
    %v76 = vld [vmem:[#allocation5 + $0xc8] sm:$0xff]
    %v77 = vld [vmem:[#allocation5 + $0xd0] sm:$0xff]
    %v78 = vld [vmem:[#allocation5 + $0xd8] sm:$0xff]
    %v79 = vld [vmem:[#allocation5 + $0xe0] sm:$0xff]
    %v80 = vld [vmem:[#allocation5 + $0xe8] sm:$0xff]
    %v81 = vld [vmem:[#allocation5 + $0xf0] sm:$0xff]
    %v82 = vld [vmem:[#allocation5 + $0xf8] sm:$0xff]
    %v83 = vld [vmem:[#allocation5 + $0x100] sm:$0xff]
    %v84 = vld [vmem:[#allocation5 + $0x108] sm:$0xff]
    %v85 = vld [vmem:[#allocation5 + $0x110] sm:$0xff]
    %v86 = vld [vmem:[#allocation5 + $0x118] sm:$0xff]
    %v87 = vld [vmem:[#allocation5 + $0x120] sm:$0xff]
    %v88 = vld [vmem:[#allocation5 + $0x128] sm:$0xff]
    %v89 = vld [vmem:[#allocation5 + $0x130] sm:$0xff]
    %v90 = vld [vmem:[#allocation5 + $0x138] sm:$0xff]
    %v91 = vld [vmem:[#allocation5 + $0x140] sm:$0xff]
    %v92 = vld [vmem:[#allocation5 + $0x148] sm:$0xff]
    %v93 = vld [vmem:[#allocation5 + $0x150] sm:$0xff]
    %v94 = vld [vmem:[#allocation5 + $0x158] sm:$0xff]
    %v95 = vld [vmem:[#allocation5 + $0x160] sm:$0xff]
    %v96 = vld [vmem:[#allocation5 + $0x168] sm:$0xff]
    %v97 = vld [vmem:[#allocation5 + $0x170] sm:$0xff]
    %v98 = vld [vmem:[#allocation5 + $0x178] sm:$0xff]
    %v99 = vld [vmem:[#allocation5 + $0x180] sm:$0xff]
    %v100 = vld [vmem:[#allocation5 + $0x188] sm:$0xff]
    %v101 = vld [vmem:[#allocation5 + $0x190] sm:$0xff]
    %v102 = vld [vmem:[#allocation5 + $0x198] sm:$0xff]
    %v103 = vld [vmem:[#allocation5 + $0x1a0] sm:$0xff]
    %v104 = vld [vmem:[#allocation5 + $0x1a8] sm:$0xff]
    %v105 = vld [vmem:[#allocation5 + $0x1b0] sm:$0xff]
    %v106 = vld [vmem:[#allocation5 + $0x1b8] sm:$0xff]
    %v107 = vld [vmem:[#allocation5 + $0x1c0] sm:$0xff]
    %v108 = vld [vmem:[#allocation5 + $0x1c8] sm:$0xff]
    %v109 = vld [vmem:[#allocation5 + $0x1d0] sm:$0xff]
    %v110 = vld [vmem:[#allocation5 + $0x1d8] sm:$0xff]
    %v111 = vld [vmem:[#allocation5 + $0x1e0] sm:$0xff]
    %v112 = vld [vmem:[#allocation5 + $0x1e8] sm:$0xff]
    %v113 = vld [vmem:[#allocation5 + $0x1f0] sm:$0xff]
    %v114 = vld [vmem:[#allocation5 + $0x1f8] sm:$0xff]
    %v115 = vld [vmem:[#allocation5 + $0x200] sm:$0xff]
    %v116 = vld [vmem:[#allocation5 + $0x208] sm:$0xff]
    %v117 = vld [vmem:[#allocation5 + $0x210] sm:$0xff]
    %v118 = vld [vmem:[#allocation5 + $0x218] sm:$0xff]
    %v119 = vld [vmem:[#allocation5 + $0x220] sm:$0xff]
    %v120 = vld [vmem:[#allocation5 + $0x228] sm:$0xff]
    %v121 = vld [vmem:[#allocation5 + $0x230] sm:$0xff]
    %v122 = vld [vmem:[#allocation5 + $0x238] sm:$0xff]
    %v123 = vld [vmem:[#allocation5 + $0x240] sm:$0xff]
    %v124 = vld [vmem:[#allocation5 + $0x248] sm:$0xff]
    %v125 = vld [vmem:[#allocation5 + $0x250] sm:$0xff]
    %v126 = vld [vmem:[#allocation5 + $0x258] sm:$0xff]
    %v127 = vld [vmem:[#allocation5 + $0x260] sm:$0xff]
    %v128 = vld [vmem:[#allocation5 + $0x268] sm:$0xff]
    %v129 = vld [vmem:[#allocation5 + $0x270] sm:$0xff]
    %v130 = vld [vmem:[#allocation5 + $0x278] sm:$0xff]
    %v131 = vld [vmem:[#allocation5 + $0x280] sm:$0xff]
    %v132 = vld [vmem:[#allocation5 + $0x288] sm:$0xff]
    %v133 = vld [vmem:[#allocation5 + $0x290] sm:$0xff]
    %v134 = vld [vmem:[#allocation5 + $0x298] sm:$0xff]
    %v135 = vld [vmem:[#allocation5 + $0x2a0] sm:$0xff]
    %v136 = vld [vmem:[#allocation5 + $0x2a8] sm:$0xff]
    %v137 = vld [vmem:[#allocation5 + $0x2b0] sm:$0xff]
    %v138 = vld [vmem:[#allocation5 + $0x2b8] sm:$0xff]
    %v139 = vld [vmem:[#allocation5 + $0x2c0] sm:$0xff]
    %v140 = vld [vmem:[#allocation5 + $0x2c8] sm:$0xff]
    %v141 = vld [vmem:[#allocation5 + $0x2d0] sm:$0xff]
    %v142 = vld [vmem:[#allocation5 + $0x2d8] sm:$0xff]
    %v143 = vld [vmem:[#allocation5 + $0x2e0] sm:$0xff]
    %v144 = vld [vmem:[#allocation5 + $0x2e8] sm:$0xff]
    %v145 = vld [vmem:[#allocation5 + $0x2f0] sm:$0xff]
    %v146 = vld [vmem:[#allocation5 + $0x2f8] sm:$0xff]
    %v147 = vld [vmem:[#allocation5 + $0x300] sm:$0xff]
    %v148 = vld [vmem:[#allocation5 + $0x308] sm:$0xff]
    %v149 = vld [vmem:[#allocation5 + $0x310] sm:$0xff]
    %v150 = vld [vmem:[#allocation5 + $0x318] sm:$0xff]
    %v151 = vld [vmem:[#allocation5 + $0x320] sm:$0xff]
    %v152 = vld [vmem:[#allocation5 + $0x328] sm:$0xff]
    %v153 = vld [vmem:[#allocation5 + $0x330] sm:$0xff]
    %v154 = vld [vmem:[#allocation5 + $0x338] sm:$0xff]
    %v155 = vld [vmem:[#allocation5 + $0x340] sm:$0xff]
    %v156 = vld [vmem:[#allocation5 + $0x348] sm:$0xff]
    %v157 = vld [vmem:[#allocation5 + $0x350] sm:$0xff]
    %v158 = vld [vmem:[#allocation5 + $0x358] sm:$0xff]
    %v159 = vld [vmem:[#allocation5 + $0x360] sm:$0xff]
    %v160 = vld [vmem:[#allocation5 + $0x368] sm:$0xff]
    %v161 = vld [vmem:[#allocation5 + $0x370] sm:$0xff]
    %v162 = vld [vmem:[#allocation5 + $0x378] sm:$0xff]
    %v163 = vld [vmem:[#allocation5 + $0x380] sm:$0xff]
    %v164 = vld [vmem:[#allocation5 + $0x388] sm:$0xff]
    %v165 = vld [vmem:[#allocation5 + $0x390] sm:$0xff]
    %v166 = vld [vmem:[#allocation5 + $0x398] sm:$0xff]
    %v167 = vld [vmem:[#allocation5 + $0x3a0] sm:$0xff]
    %v168 = vld [vmem:[#allocation5 + $0x3a8] sm:$0xff]
    %v169 = vld [vmem:[#allocation5 + $0x3b0] sm:$0xff]
    %v170 = vld [vmem:[#allocation5 + $0x3b8] sm:$0xff]
    %v171 = vld [vmem:[#allocation5 + $0x3c0] sm:$0xff]
    %v172 = vld [vmem:[#allocation5 + $0x3c8] sm:$0xff]
    %v173 = vld [vmem:[#allocation5 + $0x3d0] sm:$0xff]
    %v174 = vld [vmem:[#allocation5 + $0x3d8] sm:$0xff]
    %v175 = vld [vmem:[#allocation5 + $0x3e0] sm:$0xff]
    %v176 = vld [vmem:[#allocation5 + $0x3e8] sm:$0xff]
    %v177 = vld [vmem:[#allocation5 + $0x3f0] sm:$0xff]
    %v178 = vld [vmem:[#allocation5 + $0x3f8] sm:$0xff]
    %v179 = vld [vmem:[%s2] sm:$0x1]
    %v181 = vlaneseq
    %v182 = vshrl.u32 %v181, 7
    %v183 = vsub.s32 0, %v182
    %v184 = vrot.slane %v179, %v183
    %v194 = vcombine.low %v43, %v45
    %v195 = vcombine.high %v43, %v45
    %v196 = vcombine.low %v47, %v49
    %v197 = vcombine.high %v47, %v49
    %v199 = vunpack.c.l.s4 1983009808
    %v200 = vunpack.c.0.s8 %v199
    %v201 = vlaneseq
    %v202 = vshrl.u32 %v201, 7
    %v203 = vsub.s32 %v200, %v202
    %v204 = vrot.slane %v194, %v203
    %v206 = vunpack.c.l.s4 1983009808
    %v207 = vunpack.c.0.s8 %v206
    %v208 = vlaneseq
    %v209 = vshrl.u32 %v208, 7
    %v210 = vsub.s32 %v207, %v209
    %v211 = vrot.slane %v195, %v210
    %v213 = vunpack.c.l.s4 1983009808
    %v214 = vunpack.c.0.s8 %v213
    %v215 = vlaneseq
    %v216 = vshrl.u32 %v215, 7
    %v217 = vsub.s32 %v214, %v216
    %v218 = vrot.slane %v196, %v217
    %v220 = vunpack.c.l.s4 1983009808
    %v221 = vunpack.c.0.s8 %v220
    %v222 = vlaneseq
    %v223 = vshrl.u32 %v222, 7
    %v224 = vsub.s32 %v221, %v223
    %v225 = vrot.slane %v197, %v224
    %v226 = vcombine.low %v204, %v218
    %v227 = vcombine.high %v204, %v218
    %v228 = vcombine.low %v211, %v225
    %v229 = vcombine.high %v211, %v225
    %v230 = vcombine.low %v44, %v46
    %v231 = vcombine.high %v44, %v46
    %v232 = vcombine.low %v48, %v50
    %v233 = vcombine.high %v48, %v50
    %v235 = vunpack.c.l.s4 1983009808
    %v236 = vunpack.c.0.s8 %v235
    %v237 = vlaneseq
    %v238 = vshrl.u32 %v237, 7
    %v239 = vsub.s32 %v236, %v238
    %v240 = vrot.slane %v230, %v239
    %v242 = vunpack.c.l.s4 1983009808
    %v243 = vunpack.c.0.s8 %v242
    %v244 = vlaneseq
    %v245 = vshrl.u32 %v244, 7
    %v246 = vsub.s32 %v243, %v245
    %v247 = vrot.slane %v231, %v246
    %v249 = vunpack.c.l.s4 1983009808
    %v250 = vunpack.c.0.s8 %v249
    %v251 = vlaneseq
    %v252 = vshrl.u32 %v251, 7
    %v253 = vsub.s32 %v250, %v252
    %v254 = vrot.slane %v232, %v253
    %v256 = vunpack.c.l.s4 1983009808
    %v257 = vunpack.c.0.s8 %v256
    %v258 = vlaneseq
    %v259 = vshrl.u32 %v258, 7
    %v260 = vsub.s32 %v257, %v259
    %v261 = vrot.slane %v233, %v260
    %v262 = vcombine.low %v240, %v254
    %v263 = vcombine.high %v240, %v254
    %v264 = vcombine.low %v247, %v261
    %v265 = vcombine.high %v247, %v261
    %274 = vmatprep.subr.mxu0 0.0
    %275 = vmatpush1.msra.mxu0 %v51
    %276 = vmatprep.subr.mxu0 0.0
    %277 = vmatpush1.msra.mxu0 %v52
    %278 = vmatprep.subr.mxu0 0.0
    %279 = vmatpush1.msra.mxu0 %v53
    %280 = vmatprep.subr.mxu0 0.0
    %281 = vmatpush1.msra.mxu0 %v54
    %282 = vmatprep.subr.mxu0 0.0
    %283 = vmatpush1.msra.mxu0 %v55
    %284 = vmatprep.subr.mxu0 0.0
    %285 = vmatpush1.msra.mxu0 %v56
    %286 = vmatprep.subr.mxu0 0.0
    %287 = vmatpush1.msra.mxu0 %v57
    %288 = vmatprep.subr.mxu0 0.0
    %289 = vmatpush1.msra.mxu0 %v58
    %290 = vmatprep.subr.mxu0 0.0
    %291 = vmatpush1.msra.mxu0 %v59
    %292 = vmatprep.subr.mxu0 0.0
    %293 = vmatpush1.msra.mxu0 %v60
    %294 = vmatprep.subr.mxu0 0.0
    %295 = vmatpush1.msra.mxu0 %v61
    %296 = vmatprep.subr.mxu0 0.0
    %297 = vmatpush1.msra.mxu0 %v62
    %298 = vmatprep.subr.mxu0 0.0
    %299 = vmatpush1.msra.mxu0 %v63
    %300 = vmatprep.subr.mxu0 0.0
    %301 = vmatpush1.msra.mxu0 %v64
    %302 = vmatprep.subr.mxu0 0.0
    %303 = vmatpush1.msra.mxu0 %v65
    %304 = vmatprep.subr.mxu0 0.0
    %305 = vmatpush1.msra.mxu0 %v66
    %306 = vmatprep.subr.mxu0 0.0
    %307 = vmatpush1.msra.mxu0 %v67
    %308 = vmatprep.subr.mxu0 0.0
    %309 = vmatpush1.msra.mxu0 %v68
    %310 = vmatprep.subr.mxu0 0.0
    %311 = vmatpush1.msra.mxu0 %v69
    %312 = vmatprep.subr.mxu0 0.0
    %313 = vmatpush1.msra.mxu0 %v70
    %314 = vmatprep.subr.mxu0 0.0
    %315 = vmatpush1.msra.mxu0 %v71
    %316 = vmatprep.subr.mxu0 0.0
    %317 = vmatpush1.msra.mxu0 %v72
    %318 = vmatprep.subr.mxu0 0.0
    %319 = vmatpush1.msra.mxu0 %v73
    %320 = vmatprep.subr.mxu0 0.0
    %321 = vmatpush1.msra.mxu0 %v74
    %322 = vmatprep.subr.mxu0 0.0
    %323 = vmatpush1.msra.mxu0 %v75
    %324 = vmatprep.subr.mxu0 0.0
    %325 = vmatpush1.msra.mxu0 %v76
    %326 = vmatprep.subr.mxu0 0.0
    %327 = vmatpush1.msra.mxu0 %v77
    %328 = vmatprep.subr.mxu0 0.0
    %329 = vmatpush1.msra.mxu0 %v78
    %330 = vmatprep.subr.mxu0 0.0
    %331 = vmatpush1.msra.mxu0 %v79
    %332 = vmatprep.subr.mxu0 0.0
    %333 = vmatpush1.msra.mxu0 %v80
    %334 = vmatprep.subr.mxu0 0.0
    %335 = vmatpush1.msra.mxu0 %v81
    %336 = vmatprep.subr.mxu0 0.0
    %337 = vmatpush1.msra.mxu0 %v82
    %338 = vmatprep.mubr.f32.mxu0 %v227
    %339 = vmatmul.mubr.f32.gmra.mrb[0].mxu0 %v226
    %v340 = vpop.f32.mrb[0].mxu0
    %v341 = vadd.f32 %v184, %v340
    %v342 = vpop.f32.mrb[0].mxu0
    %343 = vdwg.mxu0
    %344 = vmatprep.subr.mxu0 0.0
    %345 = vmatpush1.msra.mxu0 %v83
    %346 = vmatprep.subr.mxu0 0.0
    %347 = vmatpush1.msra.mxu0 %v84
    %348 = vmatprep.subr.mxu0 0.0
    %349 = vmatpush1.msra.mxu0 %v85
    %350 = vmatprep.subr.mxu0 0.0
    %351 = vmatpush1.msra.mxu0 %v86
    %352 = vmatprep.subr.mxu0 0.0
    %353 = vmatpush1.msra.mxu0 %v87
    %354 = vmatprep.subr.mxu0 0.0
    %355 = vmatpush1.msra.mxu0 %v88
    %356 = vmatprep.subr.mxu0 0.0
    %357 = vmatpush1.msra.mxu0 %v89
    %358 = vmatprep.subr.mxu0 0.0
    %359 = vmatpush1.msra.mxu0 %v90
    %360 = vmatprep.subr.mxu0 0.0
    %361 = vmatpush1.msra.mxu0 %v91
    %362 = vmatprep.subr.mxu0 0.0
    %363 = vmatpush1.msra.mxu0 %v92
    %364 = vmatprep.subr.mxu0 0.0
    %365 = vmatpush1.msra.mxu0 %v93
    %366 = vmatprep.subr.mxu0 0.0
    %367 = vmatpush1.msra.mxu0 %v94
    %368 = vmatprep.subr.mxu0 0.0
    %369 = vmatpush1.msra.mxu0 %v95
    %370 = vmatprep.subr.mxu0 0.0
    %371 = vmatpush1.msra.mxu0 %v96
    %372 = vmatprep.subr.mxu0 0.0
    %373 = vmatpush1.msra.mxu0 %v97
    %374 = vmatprep.subr.mxu0 0.0
    %375 = vmatpush1.msra.mxu0 %v98
    %376 = vmatprep.subr.mxu0 0.0
    %377 = vmatpush1.msra.mxu0 %v99
    %378 = vmatprep.subr.mxu0 0.0
    %379 = vmatpush1.msra.mxu0 %v100
    %380 = vmatprep.subr.mxu0 0.0
    %381 = vmatpush1.msra.mxu0 %v101
    %382 = vmatprep.subr.mxu0 0.0
    %383 = vmatpush1.msra.mxu0 %v102
    %384 = vmatprep.subr.mxu0 0.0
    %385 = vmatpush1.msra.mxu0 %v103
    %386 = vmatprep.subr.mxu0 0.0
    %387 = vmatpush1.msra.mxu0 %v104
    %388 = vmatprep.subr.mxu0 0.0
    %389 = vmatpush1.msra.mxu0 %v105
    %390 = vmatprep.subr.mxu0 0.0
    %391 = vmatpush1.msra.mxu0 %v106
    %392 = vmatprep.subr.mxu0 0.0
    %393 = vmatpush1.msra.mxu0 %v107
    %394 = vmatprep.subr.mxu0 0.0
    %395 = vmatpush1.msra.mxu0 %v108
    %396 = vmatprep.subr.mxu0 0.0
    %397 = vmatpush1.msra.mxu0 %v109
    %398 = vmatprep.subr.mxu0 0.0
    %399 = vmatpush1.msra.mxu0 %v110
    %400 = vmatprep.subr.mxu0 0.0
    %401 = vmatpush1.msra.mxu0 %v111
    %402 = vmatprep.subr.mxu0 0.0
    %403 = vmatpush1.msra.mxu0 %v112
    %404 = vmatprep.subr.mxu0 0.0
    %405 = vmatpush1.msra.mxu0 %v113
    %406 = vmatprep.subr.mxu0 0.0
    %407 = vmatpush1.msra.mxu0 %v114
    %408 = vmatprep.mubr.f32.mxu0 %v229
    %409 = vmatmul.mubr.f32.gmra.mrb[0].mxu0 %v228
    %v410 = vpop.f32.mrb[0].mxu0
    %v411 = vadd.f32 %v341, %v410
    %v412 = vpop.f32.mrb[0].mxu0
    %413 = vdwg.mxu0
    %414 = vmatprep.subr.mxu0 0.0
    %415 = vmatpush1.msra.mxu0 %v115
    %416 = vmatprep.subr.mxu0 0.0
    %417 = vmatpush1.msra.mxu0 %v116
    %418 = vmatprep.subr.mxu0 0.0
    %419 = vmatpush1.msra.mxu0 %v117
    %420 = vmatprep.subr.mxu0 0.0
    %421 = vmatpush1.msra.mxu0 %v118
    %422 = vmatprep.subr.mxu0 0.0
    %423 = vmatpush1.msra.mxu0 %v119
    %424 = vmatprep.subr.mxu0 0.0
    %425 = vmatpush1.msra.mxu0 %v120
    %426 = vmatprep.subr.mxu0 0.0
    %427 = vmatpush1.msra.mxu0 %v121
    %428 = vmatprep.subr.mxu0 0.0
    %429 = vmatpush1.msra.mxu0 %v122
    %430 = vmatprep.subr.mxu0 0.0
    %431 = vmatpush1.msra.mxu0 %v123
    %432 = vmatprep.subr.mxu0 0.0
    %433 = vmatpush1.msra.mxu0 %v124
    %434 = vmatprep.subr.mxu0 0.0
    %435 = vmatpush1.msra.mxu0 %v125
    %436 = vmatprep.subr.mxu0 0.0
    %437 = vmatpush1.msra.mxu0 %v126
    %438 = vmatprep.subr.mxu0 0.0
    %439 = vmatpush1.msra.mxu0 %v127
    %440 = vmatprep.subr.mxu0 0.0
    %441 = vmatpush1.msra.mxu0 %v128
    %442 = vmatprep.subr.mxu0 0.0
    %443 = vmatpush1.msra.mxu0 %v129
    %444 = vmatprep.subr.mxu0 0.0
    %445 = vmatpush1.msra.mxu0 %v130
    %446 = vmatprep.subr.mxu0 0.0
    %447 = vmatpush1.msra.mxu0 %v131
    %448 = vmatprep.subr.mxu0 0.0
    %449 = vmatpush1.msra.mxu0 %v132
    %450 = vmatprep.subr.mxu0 0.0
    %451 = vmatpush1.msra.mxu0 %v133
    %452 = vmatprep.subr.mxu0 0.0
    %453 = vmatpush1.msra.mxu0 %v134
    %454 = vmatprep.subr.mxu0 0.0
    %455 = vmatpush1.msra.mxu0 %v135
    %456 = vmatprep.subr.mxu0 0.0
    %457 = vmatpush1.msra.mxu0 %v136
    %458 = vmatprep.subr.mxu0 0.0
    %459 = vmatpush1.msra.mxu0 %v137
    %460 = vmatprep.subr.mxu0 0.0
    %461 = vmatpush1.msra.mxu0 %v138
    %462 = vmatprep.subr.mxu0 0.0
    %463 = vmatpush1.msra.mxu0 %v139
    %464 = vmatprep.subr.mxu0 0.0
    %465 = vmatpush1.msra.mxu0 %v140
    %466 = vmatprep.subr.mxu0 0.0
    %467 = vmatpush1.msra.mxu0 %v141
    %468 = vmatprep.subr.mxu0 0.0
    %469 = vmatpush1.msra.mxu0 %v142
    %470 = vmatprep.subr.mxu0 0.0
    %471 = vmatpush1.msra.mxu0 %v143
    %472 = vmatprep.subr.mxu0 0.0
    %473 = vmatpush1.msra.mxu0 %v144
    %474 = vmatprep.subr.mxu0 0.0
    %475 = vmatpush1.msra.mxu0 %v145
    %476 = vmatprep.subr.mxu0 0.0
    %477 = vmatpush1.msra.mxu0 %v146
    %478 = vmatprep.mubr.f32.mxu0 %v263
    %479 = vmatmul.mubr.f32.gmra.mrb[0].mxu0 %v262
    %v480 = vpop.f32.mrb[0].mxu0
    %v481 = vadd.f32 %v411, %v480
    %v482 = vpop.f32.mrb[0].mxu0
    %483 = vdwg.mxu0
    %484 = vmatprep.subr.mxu0 0.0
    %485 = vmatpush1.msra.mxu0 %v147
    %486 = vmatprep.subr.mxu0 0.0
    %487 = vmatpush1.msra.mxu0 %v148
    %488 = vmatprep.subr.mxu0 0.0
    %489 = vmatpush1.msra.mxu0 %v149
    %490 = vmatprep.subr.mxu0 0.0
    %491 = vmatpush1.msra.mxu0 %v150
    %492 = vmatprep.subr.mxu0 0.0
    %493 = vmatpush1.msra.mxu0 %v151
    %494 = vmatprep.subr.mxu0 0.0
    %495 = vmatpush1.msra.mxu0 %v152
    %496 = vmatprep.subr.mxu0 0.0
    %497 = vmatpush1.msra.mxu0 %v153
    %498 = vmatprep.subr.mxu0 0.0
    %499 = vmatpush1.msra.mxu0 %v154
    %500 = vmatprep.subr.mxu0 0.0
    %501 = vmatpush1.msra.mxu0 %v155
    %502 = vmatprep.subr.mxu0 0.0
    %503 = vmatpush1.msra.mxu0 %v156
    %504 = vmatprep.subr.mxu0 0.0
    %505 = vmatpush1.msra.mxu0 %v157
    %506 = vmatprep.subr.mxu0 0.0
    %507 = vmatpush1.msra.mxu0 %v158
    %508 = vmatprep.subr.mxu0 0.0
    %509 = vmatpush1.msra.mxu0 %v159
    %510 = vmatprep.subr.mxu0 0.0
    %511 = vmatpush1.msra.mxu0 %v160
    %512 = vmatprep.subr.mxu0 0.0
    %513 = vmatpush1.msra.mxu0 %v161
    %514 = vmatprep.subr.mxu0 0.0
    %515 = vmatpush1.msra.mxu0 %v162
    %516 = vmatprep.subr.mxu0 0.0
    %517 = vmatpush1.msra.mxu0 %v163
    %518 = vmatprep.subr.mxu0 0.0
    %519 = vmatpush1.msra.mxu0 %v164
    %520 = vmatprep.subr.mxu0 0.0
    %521 = vmatpush1.msra.mxu0 %v165
    %522 = vmatprep.subr.mxu0 0.0
    %523 = vmatpush1.msra.mxu0 %v166
    %524 = vmatprep.subr.mxu0 0.0
    %525 = vmatpush1.msra.mxu0 %v167
    %526 = vmatprep.subr.mxu0 0.0
    %527 = vmatpush1.msra.mxu0 %v168
    %528 = vmatprep.subr.mxu0 0.0
    %529 = vmatpush1.msra.mxu0 %v169
    %530 = vmatprep.subr.mxu0 0.0
    %531 = vmatpush1.msra.mxu0 %v170
    %532 = vmatprep.subr.mxu0 0.0
    %533 = vmatpush1.msra.mxu0 %v171
    %534 = vmatprep.subr.mxu0 0.0
    %535 = vmatpush1.msra.mxu0 %v172
    %536 = vmatprep.subr.mxu0 0.0
    %537 = vmatpush1.msra.mxu0 %v173
    %538 = vmatprep.subr.mxu0 0.0
    %539 = vmatpush1.msra.mxu0 %v174
    %540 = vmatprep.subr.mxu0 0.0
    %541 = vmatpush1.msra.mxu0 %v175
    %542 = vmatprep.subr.mxu0 0.0
    %543 = vmatpush1.msra.mxu0 %v176
    %544 = vmatprep.subr.mxu0 0.0
    %545 = vmatpush1.msra.mxu0 %v177
    %546 = vmatprep.subr.mxu0 0.0
    %547 = vmatpush1.msra.mxu0 %v178
    %548 = vmatprep.mubr.f32.mxu0 %v265
    %549 = vmatmul.mubr.f32.gmra.mrb[0].mxu0 %v264
    %v550 = vpop.f32.mrb[0].mxu0
    %v551 = vadd.f32 %v481, %v550
    %v552 = vpop.f32.mrb[0].mxu0
    %553 = vdwg.mxu0
    %v554 = vlaneseq
    %v555 = vand.u32 %v554, 127
    %vm556 = vcmask 80896
    %v557 = vsel %vm556, %v551, -inf
    %558 = vmax.xlane.f32.xlu0 %v557
    %v559 = vpop.xlane.xlu0 %558
    %vm560 = vcmp.eq.f32.partialorder %v551, %v559
    %v561 = vsel %vm560, %v555, 10
    %v562 = vsel %vm556, %v561, 2147483647
    %v563 = vand.u32 %v562, 65535
    %v564 = vshra.s32 %v562, 16
    %v565 = vcvt.s32.f32 %v563
    %v566 = vcvt.s32.f32 %v564
    %567 = vmin.xlane.f32.xlu0 %v566
    %v568 = vpop.xlane.xlu0 %567
    %vm569 = vcmp.eq.f32.partialorder %v566, %v568
    %v570 = vsel %vm569, %v565, inf
    %571 = vmin.xlane.f32.xlu0 %v570
    %v572 = vpop.xlane.xlu0 %571
    %v573 = vcvt.f32.s32 %v572
    %v574 = vcvt.f32.s32 %v568
    %v575 = vshll.u32 %v574, 16
    %v576 = vadd.s32 %v575, %v573
    %vm577 = vcmp.eq.s32.totalorder %v576, 9
    %v578 = vadd.s32 %v576, 1
    %v579 = vsel %vm577, 0, %v578
    %v580 = vlaneseq
    %v581 = vshrl.u32 %v580, 7
    %vm582 = vcmp.lt.s32.totalorder %v581, 2
    %vm583 = vcmp.eq.s32.totalorder %v579, %v555
    %v584 = vsel %vm582, 1, 0
    %vm585 = vcmp.eq.s32.totalorder %v584, 1
    %vm586 = vmand %vm583, %vm585
    %v587 = vsel %vm586, 1.0, 0.0
    %v588 = vsel %vm556, %v587, -inf
    %v589 = vrot.slane %v588, 4
    %v590 = vmax.f32 %v588, %v589
    %v591 = vrot.slane %v590, 2
    %v592 = vmax.f32 %v590, %v591
    %v593 = vrot.slane %v592, 1
    %v594 = vmax.f32 %v592, %v593
    %vm595 = vcmp.gt.f32.partialorder %v594, 0.0
    %597 = vrot.lane.b32.xlu0 %v551, 1
    %v598 = vpop.permute.xlu0 %597
    %vm600 = vcmp.gt.f32.partialorder %v551, %v598
    %v601 = vsel %vm600, 1, 0
    %602 = vset.pattern.permute.xlu0 11
    %603 = vperm.xlu0 %602, %v601
    %v604 = vpop.permute.xlu0 %603
    %vm605 = vcmp.eq.s32.totalorder %v604, 1
    %v606 = vsel %vm595, 1, 0
    %vm607 = vcmp.eq.s32.totalorder %v606, 1
    %v608 = vsel %vm607, 1, 0
    %vm609 = vcmask 1042434
    %v610 = vsel %vm609, %v608, %v608
    %vm611 = vcmask 1043459
    %v612 = vsel %vm611, %v608, %v610
    %vm613 = vcmask 1044484
    %v614 = vsel %vm613, %v608, %v612
    %vm615 = vcmask 1045509
    %v616 = vsel %vm615, %v608, %v614
    %vm617 = vcmask 1046534
    %v618 = vsel %vm617, %v608, %v616
    %vm619 = vcmask 1047559
    %v620 = vsel %vm619, %v608, %v618
    %vm621 = vcmp.ne.s32.totalorder %v620, 0
    %vm622 = vmand %vm605, %vm621
    %v623 = vadd.f32 %v551, 1000.0
    %v624 = vsel %vm622, %v623, %v551
    %625 = vst.msk [vmem:[#allocation7] sm:$0xff] %vm556, %v624
    // Predicated region
    $region22: #{tpu_custom_call.1} parent=1 // pred_check
      _
    $region23: #{tpu_custom_call.1} parent=1 // pred_check_branch
      %627 = sbr.rel (0) target = $region25
    $region24: #{tpu_custom_call.1} parent=1 // pred_region
      %s629 = ssub.s32 128, 32
      %630 = vsyncadd [#allocation4], %s629
      %s631 = sshll.u32 [#allocation7], 4
      %s632 = int_to_ptr.vmem [resolvable:$true] %s631
      %637 = dma.vmem_to_hbm [thread:$0]  %s632, 32, %s3, [#allocation4], 32, 32, 2
    $region25: #{tpu_custom_call.1} parent=1 // pred_fallthru
      _
    // Predicated region
    $region26: #{tpu_custom_call.1} parent=1 // pred_check
      _
    $region27: #{tpu_custom_call.1} parent=1 // pred_check_branch
      %639 = sbr.rel (0) target = $region29
    $region28: #{tpu_custom_call.1} parent=1 // pred_region
      %640 = dma.done [#allocation4], 128
    $region29: #{tpu_custom_call.1} parent=1 // pred_fallthru
      _
    %641 = vsyncpa [#allocation3], 1
    %642 = vsyncpa [#allocation6], 1
    %643 = vsyncpa [#allocation4], 1

</llo_original>
